<compile_context>
chip_gen: v5e
topology: v5e:2x2
jax: 0.10.0
libtpu: 0.0.40
codegen_flags: <defaults>
</compile_context>

<pallas_src>
import functools
import math

import jax
import jax.numpy as jnp
from jax.experimental import pallas as pl
from jax.experimental.pallas import tpu as pltpu

EPS = 1e-5
_TILE_BYTES = 2 * 1024 * 1024       # per single input block (in+out double-buffered ~ 8 MiB)
_VMEM_LIMIT = 32 * 1024 * 1024      # safe on v5e/v6e/v7x


def _round_up(a, b):
    return (a + b - 1) // b * b


def _choose_row_tile(n_rows, row_bytes, mult=8, tile_bytes=_TILE_BYTES):
    """Largest row tile (multiple of `mult`) within the byte budget, rebalanced
    so the last block is not mostly padding and the grid has >= 2 steps when
    there is enough work (v7x has 2 TensorCores)."""
    full = _round_up(n_rows, mult)
    tr = max(mult, (tile_bytes // max(row_bytes, 1)) // mult * mult)
    if tr >= full:
        return _round_up((full + 1) // 2, mult) if full > mult else full
    n_blocks = -(-n_rows // tr)                       # cdiv
    return _round_up(-(-n_rows // n_blocks), mult)    # <= tr, so still in budget


# --------------------- direct path (C >= 128: already lane-dense) -----------

def _ln_direct_kernel(x_ref, w_ref, o_ref, *, c):
    x = x_ref[...].astype(jnp.float32)                       # (TR, C)
    inv_c = 1.0 / c
    s1 = jnp.sum(x, axis=-1, keepdims=True)                  # (TR, 1)
    s2 = jnp.sum(x * x, axis=-1, keepdims=True)              # (TR, 1)
    mean = s1 * inv_c
    var = jnp.maximum(s2 * inv_c - mean * mean, 0.0)
    inv = jax.lax.rsqrt(var + EPS)
    w = w_ref[...].astype(jnp.float32)                       # (1, C)
    o_ref[...] = (x * inv * w).astype(o_ref.dtype)


def _ln_direct(x2, weight):
    rows, c = x2.shape
    tr = _choose_row_tile(rows, c * x2.dtype.itemsize)
    rows_p = _round_up(rows, tr)
    if rows_p != rows:
        x2 = jnp.pad(x2, ((0, rows_p - rows), (0, 0)))
    w2 = weight.reshape(1, c)

    out = pl.pallas_call(
        functools.partial(_ln_direct_kernel, c=c),
        out_shape=jax.ShapeDtypeStruct((rows_p, c), x2.dtype),
        grid=(rows_p // tr,),
        in_specs=[
            pl.BlockSpec((tr, c), lambda i: (i, 0)),
            pl.BlockSpec((1, c), lambda i: (0, 0)),
        ],
        out_specs=pl.BlockSpec((tr, c), lambda i: (i, 0)),
        compiler_params=pltpu.CompilerParams(
            dimension_semantics=("parallel",),
            vmem_limit_bytes=_VMEM_LIMIT,
        ),
    )(x2, w2)
    return out[:rows] if rows_p != rows else out


# ---------------- packed path (C < 128: make lanes dense, W = G*C) ----------

def _ln_packed_kernel(x_ref, w_ref, m_ref, mt_ref, o_ref, *, c):
    x = x_ref[...].astype(jnp.float32)                        # (TR, W) lane-dense
    m = m_ref[...]                                            # (W, G) group indicator
    mt = mt_ref[...]                                          # (G, W)
    inv_c = 1.0 / c
    s1 = jnp.dot(x, m, preferred_element_type=jnp.float32)    # (TR, G) per-row sums
    s2 = jnp.dot(x * x, m, preferred_element_type=jnp.float32)
    mean = s1 * inv_c
    var = jnp.maximum(s2 * inv_c - mean * mean, 0.0)
    inv = jax.lax.rsqrt(var + EPS)                            # (TR, G)
    inv_b = jnp.dot(inv, mt, preferred_element_type=jnp.float32)  # (TR, W) broadcast
    w = w_ref[...].astype(jnp.float32)                        # (1, W) tiled weight
    o_ref[...] = (x * inv_b * w).astype(o_ref.dtype)


def _ln_packed(x2, weight, g):
    rows, c = x2.shape
    w_lanes = g * c                                           # multiple of 128
    srows = -(-rows // g)
    tr = _choose_row_tile(srows, w_lanes * x2.dtype.itemsize)
    srows_p = _round_up(srows, tr)
    rows_p = srows_p * g
    if rows_p != rows:
        x2 = jnp.pad(x2, ((0, rows_p - rows), (0, 0)))
    xp = x2.reshape(srows_p, w_lanes)                         # contiguous (free) reshape
    wp = jnp.tile(weight, g).reshape(1, w_lanes)
    grp = jnp.arange(w_lanes, dtype=jnp.int32) // c
    m = (grp[:, None] == jnp.arange(g, dtype=jnp.int32)[None, :]).astype(jnp.float32)
    mt = m.T

    out = pl.pallas_call(
        functools.partial(_ln_packed_kernel, c=c),
        out_shape=jax.ShapeDtypeStruct((srows_p, w_lanes), x2.dtype),
        grid=(srows_p // tr,),
        in_specs=[
            pl.BlockSpec((tr, w_lanes), lambda i: (i, 0)),
            pl.BlockSpec((1, w_lanes), lambda i: (0, 0)),
            pl.BlockSpec((w_lanes, g), lambda i: (0, 0)),
            pl.BlockSpec((g, w_lanes), lambda i: (0, 0)),
        ],
        out_specs=pl.BlockSpec((tr, w_lanes), lambda i: (i, 0)),
        compiler_params=pltpu.CompilerParams(
            dimension_semantics=("parallel",),
            vmem_limit_bytes=_VMEM_LIMIT,
        ),
    )(xp, wp, m, mt)
    out = out.reshape(rows_p, c)
    return out[:rows] if rows_p != rows else out


# ------------------------------- public wrapper ------------------------------

def biasfree_layernorm(x, weight):
    """x: (..., C), weight: (C,). Matches BiasFree_LayerNorm.forward."""
    orig_shape = x.shape
    c = orig_shape[-1]
    assert weight.shape == (c,)
    x2 = x.reshape(-1, c)

    if c >= 128:
        out = _ln_direct(x2, weight)
    else:
        g = math.lcm(c, 128) // c
        if g * c <= 512:          # packing stays cheap (<= 4 vregs per logical row group)
            out = _ln_packed(x2, weight, g)
        else:                     # awkward C (e.g. large odd); plain layout fallback
            out = _ln_direct(x2, weight)
    return out.reshape(orig_shape)


if __name__ == "__main__":
    key = jax.random.PRNGKey(0)
    k1, k2, k3, k4 = jax.random.split(key, 4)

    def _ref(x, w):
        sigma = jnp.var(x, axis=-1, keepdims=True)
        return x / jnp.sqrt(sigma + EPS) * w

    # Primary case: normalized_shape = 32 (module init: weight = ones).
    B, S, C = 2, 8, 32
    x = jax.random.normal(k1, (B, S, C), dtype=jnp.float32)
    weight = jnp.ones((C,), dtype=jnp.float32)
    out = jax.block_until_ready(biasfree_layernorm(x, weight))
    assert out.shape == x.shape and out.dtype == x.dtype
    assert jnp.allclose(out, _ref(x, weight), atol=1e-4, rtol=1e-4)

    # Exercise padding + Restormer-style C=48 (packed to W=384 lanes).
    x2 = jax.random.normal(k2, (3, 5, 48), dtype=jnp.float32)
    w2 = jax.random.normal(k3, (48,), dtype=jnp.float32)
    out2 = jax.block_until_ready(biasfree_layernorm(x2, w2))
    assert jnp.allclose(out2, _ref(x2, w2), atol=1e-4, rtol=1e-4)

    # Exercise the direct (C >= 128) path.
    x3 = jax.random.normal(k4, (2, 4, 128), dtype=jnp.float32)
    w3 = jnp.ones((128,), dtype=jnp.float32)
    out3 = jax.block_until_ready(biasfree_layernorm(x3, w3))
    assert jnp.allclose(out3, _ref(x3, w3), atol=1e-4, rtol=1e-4)

    print("KERNEL_OK")
</pallas_src>

<mosaic_0001>
module attributes {stable_mosaic.version = 11 : i64} {
  func.func @_ln_packed_kernel(%arg0: i32, %arg1: memref<8x128xf32, #tpu.memory_space<vmem>>, %arg2: memref<1x128xf32, #tpu.memory_space<vmem>>, %arg3: memref<128x4xf32, #tpu.memory_space<vmem>>, %arg4: memref<4x128xf32, #tpu.memory_space<vmem>>, %arg5: memref<8x128xf32, #tpu.memory_space<vmem>>) attributes {dimension_semantics = [#tpu.dimension_semantics<parallel>], iteration_bounds = array<i64: 1>, scalar_prefetch = 0 : i64, scratch_operands = 0 : i64, tpu.core_type = #tpu.core_type<tc>, window_params = [{transform_indices = @transform_0, window_bounds = array<i64: 8, 128>}, {pipeline_mode = #tpu.pipeline_mode<synchronous>, transform_indices = @transform_1, window_bounds = array<i64: 1, 128>}, {pipeline_mode = #tpu.pipeline_mode<synchronous>, transform_indices = @transform_2, window_bounds = array<i64: 128, 4>}, {pipeline_mode = #tpu.pipeline_mode<synchronous>, transform_indices = @transform_3, window_bounds = array<i64: 4, 128>}, {transform_indices = @transform_4, window_bounds = array<i64: 8, 128>}]} {
    %c0 = arith.constant 0 : index
    %c0_0 = arith.constant 0 : index
    %0 = vector.load %arg1[%c0, %c0_0] : memref<8x128xf32, #tpu.memory_space<vmem>>, vector<8x128xf32>
    %c0_1 = arith.constant 0 : index
    %c0_2 = arith.constant 0 : index
    %1 = vector.load %arg3[%c0_1, %c0_2] : memref<128x4xf32, #tpu.memory_space<vmem>>, vector<128x4xf32>
    %c0_3 = arith.constant 0 : index
    %c0_4 = arith.constant 0 : index
    %2 = vector.load %arg4[%c0_3, %c0_4] : memref<4x128xf32, #tpu.memory_space<vmem>>, vector<4x128xf32>
    %cst = arith.constant dense<0.000000e+00> : vector<8x4xf32>
    %3 = tpu.matmul %0, %1, %cst {dimension_numbers = #tpu.dot_dimension_numbers<[1], [0], [0], [1], [0, 0, 1, 1], [], []>} : vector<8x128xf32>, vector<128x4xf32>, vector<8x4xf32> -> vector<8x4xf32>
    %4 = arith.mulf %0, %0 : vector<8x128xf32>
    %cst_5 = arith.constant dense<0.000000e+00> : vector<8x4xf32>
    %5 = tpu.matmul %4, %1, %cst_5 {dimension_numbers = #tpu.dot_dimension_numbers<[1], [0], [0], [1], [0, 0, 1, 1], [], []>} : vector<8x128xf32>, vector<128x4xf32>, vector<8x4xf32> -> vector<8x4xf32>
    %cst_6 = arith.constant 3.125000e-02 : f32
    %6 = vector.broadcast %cst_6 : f32 to vector<8x4xf32>
    %7 = arith.mulf %3, %6 : vector<8x4xf32>
    %cst_7 = arith.constant 3.125000e-02 : f32
    %8 = vector.broadcast %cst_7 : f32 to vector<8x4xf32>
    %9 = arith.mulf %5, %8 : vector<8x4xf32>
    %10 = arith.mulf %7, %7 : vector<8x4xf32>
    %11 = arith.subf %9, %10 : vector<8x4xf32>
    %cst_8 = arith.constant 0.000000e+00 : f32
    %12 = vector.broadcast %cst_8 : f32 to vector<8x4xf32>
    %13 = arith.maximumf %11, %12 : vector<8x4xf32>
    %cst_9 = arith.constant 9.99999974E-6 : f32
    %14 = vector.broadcast %cst_9 : f32 to vector<8x4xf32>
    %15 = arith.addf %13, %14 : vector<8x4xf32>
    %16 = math.rsqrt %15 : vector<8x4xf32>
    %cst_10 = arith.constant dense<0.000000e+00> : vector<8x128xf32>
    %17 = tpu.matmul %16, %2, %cst_10 {dimension_numbers = #tpu.dot_dimension_numbers<[1], [0], [0], [1], [0, 0, 1, 1], [], []>} : vector<8x4xf32>, vector<4x128xf32>, vector<8x128xf32> -> vector<8x128xf32>
    %c0_11 = arith.constant 0 : index
    %c0_12 = arith.constant 0 : index
    %18 = vector.load %arg2[%c0_11, %c0_12] : memref<1x128xf32, #tpu.memory_space<vmem>>, vector<1x128xf32>
    %19 = arith.mulf %0, %17 : vector<8x128xf32>
    %20 = vector.broadcast %18 : vector<1x128xf32> to vector<8x128xf32>
    %21 = arith.mulf %19, %20 : vector<8x128xf32>
    %c0_13 = arith.constant 0 : index
    %c0_14 = arith.constant 0 : index
    %22 = vector.load %arg5[%c0_13, %c0_14] : memref<8x128xf32, #tpu.memory_space<vmem>>, vector<8x128xf32>
    tpu.vector_store %arg5[%c0_13, %c0_14], %21 {strides = array<i32>} : memref<8x128xf32, #tpu.memory_space<vmem>>, vector<8x128xf32>,
    return
  }
  func.func @transform_0(%arg0: i32) -> (i32, i32) {
    %c0_i32 = arith.constant 0 : i32
    %c0_i32_0 = arith.constant 0 : i32
    return %arg0, %c0_i32 : i32, i32
  }
  func.func @transform_1(%arg0: i32) -> (i32, i32) {
    %c0_i32 = arith.constant 0 : i32
    %c0_i32_0 = arith.constant 0 : i32
    %c0_i32_1 = arith.constant 0 : i32
    return %c0_i32, %c0_i32_0 : i32, i32
  }
  func.func @transform_2(%arg0: i32) -> (i32, i32) {
    %c0_i32 = arith.constant 0 : i32
    %c0_i32_0 = arith.constant 0 : i32
    %c0_i32_1 = arith.constant 0 : i32
    return %c0_i32, %c0_i32_0 : i32, i32
  }
  func.func @transform_3(%arg0: i32) -> (i32, i32) {
    %c0_i32 = arith.constant 0 : i32
    %c0_i32_0 = arith.constant 0 : i32
    %c0_i32_1 = arith.constant 0 : i32
    return %c0_i32, %c0_i32_0 : i32, i32
  }
  func.func @transform_4(%arg0: i32) -> (i32, i32) {
    %c0_i32 = arith.constant 0 : i32
    %c0_i32_0 = arith.constant 0 : i32
    return %arg0, %c0_i32 : i32, i32
  }
}

</mosaic_0001>

<llo_original>
// kernel: tpu_custom_call.1
$region0: #{tpu_custom_call.1}
  #allocation0 [shape = 'u32[]', space=smem, size = 0x4, offset = 0x4, fixed_abs, tag = 'smem constant byte address 0x4 - core index']
  #allocation1 [shape = 'u32[72,128]{1,0:T(1,128)}', space=vmem, size = 0x9000, scoped, tag = 'internal scratch']
  %s0 = inlined_call_operand.vmem [shape: f32[8,128], index: 0, kind: input, shape index: {}]
  %s1 = inlined_call_operand.vmem [shape: f32[1,128], index: 1, kind: input, shape index: {}]
  %s2 = inlined_call_operand.vmem [shape: f32[128,4], index: 2, kind: input, shape index: {}]
  %s3 = inlined_call_operand.vmem [shape: f32[4,128], index: 3, kind: input, shape index: {}]
  %s4 = inlined_call_operand.hbm [shape: f32[8,128], index: 4, kind: output, shape index: {}]
  %s5 = sld [smem:[#allocation0]]
  $region26: #{tpu_custom_call.1} parent=0
    _
  %s7 = ssub.s32 1, %s5
  %s8 = scalar_select 0, %s7, %s5
  $region1: #{tpu_custom_call.1} parent=0
    #allocation2 [shape = 'u8[4096]{0}', space=vmem, size = 0x1000, scoped, tag = 'output window, operand 0, single buffered']
    #allocation3 [shape = 's32[1]{0}', space=sflag, size = 0x4, scoped, tag = 'scoped memory for tpu_custom_call.1']
    %9 = vsyncpa [#allocation3], 0
    // Predicated region
    $region2: #{tpu_custom_call.1} parent=1 // pred_check
      _
    $region3: #{tpu_custom_call.1} parent=1 // pred_check_branch
      %11 = sbr.rel (0) target = $region5
    $region4: #{tpu_custom_call.1} parent=1 // pred_region
      _
    $region5: #{tpu_custom_call.1} parent=1 // pred_fallthru
      _
    // Predicated region
    $region6: #{tpu_custom_call.1} parent=1 // pred_check
      _
    $region7: #{tpu_custom_call.1} parent=1 // pred_check_branch
      %13 = sbr.rel (0) target = $region9
    $region8: #{tpu_custom_call.1} parent=1 // pred_region
      _
    $region9: #{tpu_custom_call.1} parent=1 // pred_fallthru
      _
    // Predicated region
    $region10: #{tpu_custom_call.1} parent=1 // pred_check
      _
    $region11: #{tpu_custom_call.1} parent=1 // pred_check_branch
      %15 = sbr.rel (0) target = $region13
    $region12: #{tpu_custom_call.1} parent=1 // pred_region
      _
    $region13: #{tpu_custom_call.1} parent=1 // pred_fallthru
      _
    // Predicated region
    $region14: #{tpu_custom_call.1} parent=1 // pred_check
      _
    $region15: #{tpu_custom_call.1} parent=1 // pred_check_branch
      %17 = sbr.rel (0) target = $region17
    $region16: #{tpu_custom_call.1} parent=1 // pred_region
      _
    $region17: #{tpu_custom_call.1} parent=1 // pred_fallthru
      _
    %v18 = vld [vmem:[%s0] sm:$0xff]
    %v19 = vld [vmem:[%s2] sm:$0xff]
    %v20 = vld [vmem:[%s2 + $0x8] sm:$0xff]
    %v21 = vld [vmem:[%s2 + $0x10] sm:$0xff]
    %v22 = vld [vmem:[%s2 + $0x18] sm:$0xff]
    %v23 = vld [vmem:[%s2 + $0x20] sm:$0xff]
    %v24 = vld [vmem:[%s2 + $0x28] sm:$0xff]
    %v25 = vld [vmem:[%s2 + $0x30] sm:$0xff]
    %v26 = vld [vmem:[%s2 + $0x38] sm:$0xff]
    %v27 = vld [vmem:[%s2 + $0x40] sm:$0xff]
    %v28 = vld [vmem:[%s2 + $0x48] sm:$0xff]
    %v29 = vld [vmem:[%s2 + $0x50] sm:$0xff]
    %v30 = vld [vmem:[%s2 + $0x58] sm:$0xff]
    %v31 = vld [vmem:[%s2 + $0x60] sm:$0xff]
    %v32 = vld [vmem:[%s2 + $0x68] sm:$0xff]
    %v33 = vld [vmem:[%s2 + $0x70] sm:$0xff]
    %v34 = vld [vmem:[%s2 + $0x78] sm:$0xff]
    %v35 = vld [vmem:[%s3] sm:$0xf]
    %36 = vmatpush.msra.mxu0 %v34
    %37 = vmatpush.msra.mxu0 %v33
    %38 = vmatpush.msra.mxu0 %v32
    %39 = vmatpush.msra.mxu0 %v31
    %40 = vmatpush.msra.mxu0 %v30
    %41 = vmatpush.msra.mxu0 %v29
    %42 = vmatpush.msra.mxu0 %v28
    %43 = vmatpush.msra.mxu0 %v27
    %44 = vmatpush.msra.mxu0 %v26
    %45 = vmatpush.msra.mxu0 %v25
    %46 = vmatpush.msra.mxu0 %v24
    %47 = vmatpush.msra.mxu0 %v23
    %48 = vmatpush.msra.mxu0 %v22
    %49 = vmatpush.msra.mxu0 %v21
    %50 = vmatpush.msra.mxu0 %v20
    %51 = vmatpush.msra.mxu0 %v19
    %52 = vmatmul.f32.gmra.mxu0 %v18
    %v53 = vpop.f32.mrf.mxu0
    %v54 = vadd.f32 0.0, %v53
    %55 = vdwg.mxu0
    %v56 = vmul.f32 %v18, %v18
    %57 = vmatpush.msra.mxu0 %v34
    %58 = vmatpush.msra.mxu0 %v33
    %59 = vmatpush.msra.mxu0 %v32
    %60 = vmatpush.msra.mxu0 %v31
    %61 = vmatpush.msra.mxu0 %v30
    %62 = vmatpush.msra.mxu0 %v29
    %63 = vmatpush.msra.mxu0 %v28
    %64 = vmatpush.msra.mxu0 %v27
    %65 = vmatpush.msra.mxu0 %v26
    %66 = vmatpush.msra.mxu0 %v25
    %67 = vmatpush.msra.mxu0 %v24
    %68 = vmatpush.msra.mxu0 %v23
    %69 = vmatpush.msra.mxu0 %v22
    %70 = vmatpush.msra.mxu0 %v21
    %71 = vmatpush.msra.mxu0 %v20
    %72 = vmatpush.msra.mxu0 %v19
    %73 = vmatmul.f32.gmra.mxu0 %v56
    %v74 = vpop.f32.mrf.mxu0
    %v75 = vadd.f32 0.0, %v74
    %76 = vdwg.mxu0
    %v77 = vmul.f32 %v54, 0.03125
    %v78 = vmul.f32 %v75, 0.03125
    %v79 = vmul.f32 %v77, %v77
    %v80 = vsub.f32 %v78, %v79
    %v81 = vmax.f32 %v80, 0.0
    %v82 = vadd.f32 %v81, 1e-05
    %v83 = vrsqrt.pop %v82
    %v84 = vmul.f32 %v83, %v82
    %v85 = vmul.f32 %v84, %v83
    %v86 = vmul.f32 0.5, %v85
    %v87 = vsub.f32 1.5, %v86
    %v88 = vmul.f32 %v83, %v87
    %vm89 = vweird.f32 %v82
    %vm90 = vweird.f32 %v83
    %vm91 = vmor %vm89, %vm90
    %v92 = vsel %vm91, %v83, %v88
    %vm93 = vcmask 31744
    %v95 = vsel %vm93, %v92, 0
    %vm97 = vcmask 1043456
    %v99 = vsel %vm97, %v35, 0
    %101 = vmatpush.msra.mxu0 0.0
    %102 = vmatpush.msra.mxu0 0.0
    %103 = vmatpush.msra.mxu0 0.0
    %104 = vmatpush.msra.mxu0 0.0
    %105 = vmatpush.msra.mxu0 0.0
    %106 = vmatpush.msra.mxu0 0.0
    %107 = vmatpush.msra.mxu0 0.0
    %108 = vmatpush.msra.mxu0 0.0
    %109 = vmatpush.msra.mxu0 0.0
    %110 = vmatpush.msra.mxu0 0.0
    %111 = vmatpush.msra.mxu0 0.0
    %112 = vmatpush.msra.mxu0 0.0
    %113 = vmatpush.msra.mxu0 0.0
    %114 = vmatpush.msra.mxu0 0.0
    %115 = vmatpush.msra.mxu0 0.0
    %116 = vmatpush.msra.mxu0 %v99
    %117 = vmatmul.f32.gmra.mxu0 %v95
    %v118 = vpop.f32.mrf.mxu0
    %v119 = vadd.f32 0.0, %v118
    %120 = vdwg.mxu0
    %v121 = vld [vmem:[%s1] sm:$0x1]
    %v122 = vmul.f32 %v18, %v119
    %v124 = vperm.slane %v121, 0
    %v126 = vmul.f32 %v122, %v124
    %127 = vst [vmem:[#allocation2] sm:$0xff] %v126
    // Predicated region
    $region18: #{tpu_custom_call.1} parent=1 // pred_check
      _
    $region19: #{tpu_custom_call.1} parent=1 // pred_check_branch
      %129 = sbr.rel (0) target = $region21
    $region20: #{tpu_custom_call.1} parent=1 // pred_region
      %131 = vsyncadd [#allocation3], 0
      %s133 = sshll.u32 [#allocation2], 4
      %s134 = int_to_ptr.vmem [resolvable:$true] %s133
      %s135 = sshll.u32 %s4, 4
      %s136 = int_to_ptr.hbm [resolvable:$true] %s135
      %138 = dma.vmem_to_hbm [thread:$0]  %s134, 128, %s136, [#allocation3]
    $region21: #{tpu_custom_call.1} parent=1 // pred_fallthru
      _
    // Predicated region
    $region22: #{tpu_custom_call.1} parent=1 // pred_check
      _
    $region23: #{tpu_custom_call.1} parent=1 // pred_check_branch
      %140 = sbr.rel (0) target = $region25
    $region24: #{tpu_custom_call.1} parent=1 // pred_region
      %142 = dma.done [#allocation3], 128
    $region25: #{tpu_custom_call.1} parent=1 // pred_fallthru
      _
    %143 = vsyncpa [#allocation3], 1

</llo_original>
